<compile_context>
chip_gen: v6e
topology: v6e:2x2x1
jax: 0.10.0
libtpu: 0.0.40
codegen_flags: <defaults>
</compile_context>

<pallas_src>
import jax
import jax.numpy as jnp
from jax.experimental import pallas as pl
from jax.experimental.pallas import tpu as pltpu


# ---------------------------------------------------------------------------
# Path 1: zero-traffic aliased "view" kernel (preferred).
# ---------------------------------------------------------------------------
def _alias_view_kernel(x_ref, o_ref):
    del x_ref  # Same HBM buffer as o_ref (aliased); nothing to move.
    pltpu.touch(o_ref)  # Mark the aliased output as produced (no data movement).


def _alias_passthrough(x: jax.Array) -> jax.Array:
    return pl.pallas_call(
        _alias_view_kernel,
        out_shape=jax.ShapeDtypeStruct(x.shape, x.dtype),
        in_specs=[pl.BlockSpec(memory_space=pl.ANY)],
        out_specs=pl.BlockSpec(memory_space=pl.ANY),
        input_output_aliases={0: 0},
        compiler_params=pltpu.CompilerParams(has_side_effects=True),
    )(x)


# ---------------------------------------------------------------------------
# Path 2: pipelined lane-dense copy (fallback if the aliased no-op is rejected).
# ---------------------------------------------------------------------------
def _copy_kernel(x_ref, o_ref):
    o_ref[...] = x_ref[...]


def _pick_lane_width(n_elems: int, max_width: int = 2048):
    """Largest multiple of 128 (<= max_width) that divides n_elems, else None."""
    w = (min(max_width, n_elems) // 128) * 128
    while w >= 128:
        if n_elems % w == 0:
            return w
        w -= 128
    return None


def _pick_rows_per_block(total_rows: int, row_bytes: int, sublane: int,
                         target_block_bytes: int) -> int:
    if total_rows * row_bytes <= target_block_bytes:
        return total_rows  # full extent -> always layout-legal
    budget = max(sublane,
                 (target_block_bytes // max(1, row_bytes) // sublane) * sublane)
    # Prefer a block count that divides total_rows evenly (no masked final block).
    r, steps = budget, 0
    while r >= sublane and steps < 1024:
        if total_rows % r == 0:
            return r
        r -= sublane
        steps += 1
    return budget


def _pipelined_copy(x: jax.Array) -> jax.Array:
    n = x.size
    itemsize = jnp.dtype(x.dtype).itemsize
    sublane = max(8, 32 // itemsize)  # 8 for f32, 16 for bf16, 32 for int8/fp8

    lane = _pick_lane_width(n)
    if lane is not None:
        rows_total = n // lane
        slab_shape = (rows_total, lane)
    else:
        # No lane-dense factorization of N; fall back to (leading, prod(rest)),
        # which is still legal via the "full array dim" clause of the (8,128) rule.
        f = 1
        for d in x.shape[1:]:
            f *= d
        f = max(f, 1)
        rows_total = n // f
        slab_shape = (rows_total, f)
        lane = f

    # ~4 MiB blocks: ~96-98% of HBM roofline on v6e, safe on v5e with the explicit
    # vmem limit below.  TODO(synk): bump to 6-8 MiB + CORE_PARALLEL / pl.Buffered(3)
    # on v7x after an xprof check.
    target_block_bytes = 4 * 1024 * 1024
    rows_per_block = _pick_rows_per_block(rows_total, lane * itemsize, sublane,
                                          target_block_bytes)

    x_slab = x.reshape(slab_shape)  # free metadata-only view of contiguous data
    grid = (pl.cdiv(rows_total, rows_per_block),)
    spec = pl.BlockSpec((rows_per_block, lane), lambda i: (i, 0))

    out = pl.pallas_call(
        _copy_kernel,
        out_shape=jax.ShapeDtypeStruct(slab_shape, x.dtype),
        grid=grid,
        in_specs=[spec],
        out_specs=spec,
        compiler_params=pltpu.CompilerParams(
            dimension_semantics=("parallel",),        # shards row blocks across TCs
            vmem_limit_bytes=48 * 1024 * 1024,        # 4 x 4 MiB buffers << 64 MiB (v7x)
        ),
        cost_estimate=pl.CostEstimate(
            flops=0, transcendentals=0, bytes_accessed=2 * n * itemsize),
    )(x_slab)
    return out.reshape(x.shape)


# ---------------------------------------------------------------------------
# One-time implementation selection (probe the aliased no-op path once).
# ---------------------------------------------------------------------------
_IMPL = None


def _select_impl() -> str:
    global _IMPL
    if _IMPL is None:
        try:
            probe = jnp.arange(8 * 128, dtype=jnp.float32).reshape(8, 128)
            got = jax.block_until_ready(_alias_passthrough(probe))
            if not jnp.array_equal(got, probe):
                raise ValueError("aliased no-op view returned wrong data")
            _IMPL = "alias"
        except Exception:
            _IMPL = "copy"
    return _IMPL


# ---------------------------------------------------------------------------
# Public wrapper: ExpandTemporalDim.forward
# ---------------------------------------------------------------------------
def expand_temporal_dim(x_seq: jax.Array, T: int) -> jax.Array:
    """Equivalent of x_seq.view(T, x_seq.shape[0] // T, *x_seq.shape[1:])."""
    TB = x_seq.shape[0]
    assert TB % T == 0, "leading dim must be divisible by T"
    B = TB // T
    rest = tuple(x_seq.shape[1:])

    if _select_impl() == "alias":
        out = _alias_passthrough(x_seq)
    else:
        out = _pipelined_copy(x_seq)

    # Free metadata-only split of the leading dim back into (T, B, *rest).
    return out.reshape((T, B) + rest)


# Zero-copy entry point: donating x_seq lets XLA reuse its buffer directly for the
# aliased output, so the whole op is metadata-only (no defensive copy either).
expand_temporal_dim_donated = jax.jit(
    expand_temporal_dim, static_argnums=1, donate_argnums=0)


if __name__ == "__main__":
    T = 2
    B, C, H, W = 2, 4, 16, 16

    key = jax.random.PRNGKey(0)
    x_seq = jax.random.normal(key, (T * B, C, H, W), dtype=jnp.float32)
    y_ref = x_seq.reshape(T, B, C, H, W)  # PyTorch .view() semantics

    # Primary (aliased no-op) path, auto-falls back to the pipelined copy if needed.
    y = expand_temporal_dim(x_seq, T)
    jax.block_until_ready(y)
    assert y.shape == (T, B, C, H, W)
    assert y.dtype == x_seq.dtype
    assert jnp.array_equal(y, y_ref), "mismatch vs reference reshape"

    # Also validate the pipelined-copy fallback explicitly (bit-exact as well).
    y_copy = _pipelined_copy(x_seq).reshape(T, B, C, H, W)
    jax.block_until_ready(y_copy)
    assert jnp.array_equal(y_copy, y_ref), "fallback copy mismatch vs reference"

    print("KERNEL_OK")
</pallas_src>

<mosaic_0001>
module attributes {stable_mosaic.version = 11 : i64} {
  func.func @_alias_view_kernel(%arg0: memref<8x128xf32, #tpu.memory_space<any>>, %arg1: memref<8x128xf32, #tpu.memory_space<any>>) attributes {dimension_semantics = [], scalar_prefetch = 0 : i64, scratch_operands = 0 : i64, tpu.core_type = #tpu.core_type<tc>} {
    return
  }
}

module attributes {stable_mosaic.version = 11 : i64} {
  func.func @_copy_kernel(%arg0: i32, %arg1: memref<2x2048xf32, #tpu.memory_space<vmem>>, %arg2: memref<2x2048xf32, #tpu.memory_space<vmem>>) attributes {dimension_semantics = [#tpu.dimension_semantics<parallel>], iteration_bounds = array<i64: 1>, scalar_prefetch = 0 : i64, scratch_operands = 0 : i64, tpu.core_type = #tpu.core_type<tc>, window_params = [{transform_indices = @transform_0, window_bounds = array<i64: 2, 2048>}, {transform_indices = @transform_1, window_bounds = array<i64: 2, 2048>}]} {
    %c0 = arith.constant 0 : index
    %c0_0 = arith.constant 0 : index
    %0 = vector.load %arg1[%c0, %c0_0] : memref<2x2048xf32, #tpu.memory_space<vmem>>, vector<2x2048xf32>
    %c0_1 = arith.constant 0 : index
    %c0_2 = arith.constant 0 : index
    %1 = vector.load %arg2[%c0_1, %c0_2] : memref<2x2048xf32, #tpu.memory_space<vmem>>, vector<2x2048xf32>
    tpu.vector_store %arg2[%c0_1, %c0_2], %0 {strides = array<i32>} : memref<2x2048xf32, #tpu.memory_space<vmem>>, vector<2x2048xf32>,
    return
  }
  func.func @transform_0(%arg0: i32) -> (i32, i32) {
    %c0_i32 = arith.constant 0 : i32
    %c0_i32_0 = arith.constant 0 : i32
    return %arg0, %c0_i32 : i32, i32
  }
  func.func @transform_1(%arg0: i32) -> (i32, i32) {
    %c0_i32 = arith.constant 0 : i32
    %c0_i32_0 = arith.constant 0 : i32
    return %arg0, %c0_i32 : i32, i32
  }
}

</mosaic_0001>

<llo_original>
// kernel: tpu_custom_call.1
$region0: #{tpu_custom_call.1}
  #allocation0 [shape = 'u32[]', space=smem, size = 0x4, offset = 0x4, fixed_abs, tag = 'smem constant byte address 0x4 - core index']
  #allocation1 [shape = 'u32[144,128]{1,0:T(1,128)}', space=vmem, size = 0x12000, scoped, tag = 'internal scratch']
  %s0 = inlined_call_operand.hbm [shape: f32[8,128], index: 0, kind: input, shape index: {}, may-alias: {0,1}]
  %s1 = inlined_call_operand.hbm [shape: f32[8,128], index: 1, kind: output, shape index: {}, may-alias: {0,1}]
  %s2 = sld [smem:[#allocation0]]
  $region2: #{tpu_custom_call.1} parent=0
    _
  %s4 = ssub.s32 1, %s2
  %s5 = scalar_select 0, %s4, %s2

// kernel: tpu_custom_call.1
$region0: #{tpu_custom_call.1}
  #allocation0 [shape = 'u32[]', space=smem, size = 0x4, offset = 0x4, fixed_abs, tag = 'smem constant byte address 0x4 - core index']
  #allocation1 [shape = 'u32[144,128]{1,0:T(1,128)}', space=vmem, size = 0x12000, scoped, tag = 'internal scratch']
  %s0 = inlined_call_operand.hbm [shape: f32[2,2048], index: 0, kind: input, shape index: {}]
  %s1 = inlined_call_operand.hbm [shape: f32[2,2048], index: 1, kind: output, shape index: {}]
  %s2 = sld [smem:[#allocation0]]
  $region18: #{tpu_custom_call.1} parent=0
    _
  %s4 = ssub.s32 1, %s2
  %s5 = scalar_select 0, %s4, %s2
  $region1: #{tpu_custom_call.1} parent=0
    #allocation2 [shape = 'u8[16384]{0}', space=vmem, size = 0x4000, scoped, tag = 'input window, operand 0, single buffered']
    #allocation3 [shape = 's32[1]{0}', space=sflag, size = 0x4, scoped, tag = 'scoped memory for tpu_custom_call.1']
    #allocation4 [shape = 's32[1]{0}', space=sflag, size = 0x4, scoped, tag = 'scoped memory for tpu_custom_call.1']
    #allocation5 [shape = 'u8[16384]{0}', space=vmem, size = 0x4000, scoped, tag = 'output window, operand 0, single buffered']
    %6 = vsyncpa [#allocation3], 0
    %7 = vsyncpa [#allocation4], 0
    // Predicated region
    $region2: #{tpu_custom_call.1} parent=1 // pred_check
      _
    $region3: #{tpu_custom_call.1} parent=1 // pred_check_branch
      %9 = sbr.rel (0) target = $region5
    $region4: #{tpu_custom_call.1} parent=1 // pred_region
      %s11 = ssub.s32 512, 512
      %12 = vsyncadd [#allocation3], %s11
      %s14 = sshll.u32 [#allocation2], 4
      %s15 = int_to_ptr.vmem [resolvable:$true] %s14
      %17 = dma.hbm_to_vmem [thread:$0]  %s0, 512, %s15, [#allocation3]
    $region5: #{tpu_custom_call.1} parent=1 // pred_fallthru
      _
    // Predicated region
    $region6: #{tpu_custom_call.1} parent=1 // pred_check
      _
    $region7: #{tpu_custom_call.1} parent=1 // pred_check_branch
      %19 = sbr.rel (0) target = $region9
    $region8: #{tpu_custom_call.1} parent=1 // pred_region
      %20 = dma.done [#allocation3], 512
    $region9: #{tpu_custom_call.1} parent=1 // pred_fallthru
      _
    %v21 = vld [vmem:[#allocation2] sm:$0xff]
    %v22 = vld [vmem:[#allocation2 + $0x8] sm:$0xff]
    %v23 = vld [vmem:[#allocation2 + $0x10] sm:$0xff]
    %v24 = vld [vmem:[#allocation2 + $0x18] sm:$0xff]
    %25 = vst [vmem:[#allocation5] sm:$0xff] %v21
    %26 = vst [vmem:[#allocation5 + $0x8] sm:$0xff] %v22
    %27 = vst [vmem:[#allocation5 + $0x10] sm:$0xff] %v23
    %28 = vst [vmem:[#allocation5 + $0x18] sm:$0xff] %v24
    // Predicated region
    $region10: #{tpu_custom_call.1} parent=1 // pred_check
      _
    $region11: #{tpu_custom_call.1} parent=1 // pred_check_branch
      %30 = sbr.rel (0) target = $region13
    $region12: #{tpu_custom_call.1} parent=1 // pred_region
      %s32 = ssub.s32 512, 512
      %33 = vsyncadd [#allocation4], %s32
      %s35 = sshll.u32 [#allocation5], 4
      %s36 = int_to_ptr.vmem [resolvable:$true] %s35
      %38 = dma.vmem_to_hbm [thread:$0]  %s36, 512, %s1, [#allocation4]
    $region13: #{tpu_custom_call.1} parent=1 // pred_fallthru
      _
    // Predicated region
    $region14: #{tpu_custom_call.1} parent=1 // pred_check
      _
    $region15: #{tpu_custom_call.1} parent=1 // pred_check_branch
      %40 = sbr.rel (0) target = $region17
    $region16: #{tpu_custom_call.1} parent=1 // pred_region
      %41 = dma.done [#allocation4], 512
    $region17: #{tpu_custom_call.1} parent=1 // pred_fallthru
      _
    %42 = vsyncpa [#allocation3], 1
    %43 = vsyncpa [#allocation4], 1

</llo_original>
